<compile_context>
chip_gen: v5e
topology: v5e:2x2
jax: 0.10.0
libtpu: 0.0.40
codegen_flags: <defaults>
</compile_context>

<pallas_src>
import jax
import jax.numpy as jnp
from jax.experimental import pallas as pl
from jax.experimental.pallas import tpu as pltpu


def _make_gru_fc_kernel(tt, H, hoist_weights, unroll):
    """Builds the per-T-chunk kernel body (all shapes static at trace time)."""

    def kernel(gi_ref, w_hh_ref, b_hn_ref, w_fc_ref, b_fc_ref, out_ref, h_ref):
        # gi_ref  : (tt, B, 3H)  packed precomputed gate inputs for this chunk
        # w_hh_ref: (H, 3H)      recurrent weights, [r|z|n] columns (pre-transposed)
        # b_hn_ref: (1, H)       hidden bias of the 'n' gate (stays inside r*(...))
        # w_fc_ref: (H, O), b_fc_ref: (1, O)
        # out_ref : (B, O)       written only on the last chunk
        # h_ref   : (B, H) f32   persistent VMEM scratch carrying h across chunks
        chunk = pl.program_id(0)

        @pl.when(chunk == 0)
        def _init():
            h_ref[...] = jnp.zeros_like(h_ref)

        b_hn = b_hn_ref[...]
        if hoist_weights:
            w_hh = w_hh_ref[...]                 # small H: keep the slab in vregs
            load_w = lambda: w_hh
        else:
            load_w = lambda: w_hh_ref[...]       # large H: don't pin 3*(H,H) vregs

        def step(t, h):
            gi = gi_ref[t]                                            # (B, 3H)
            gh = jnp.dot(h, load_w(),
                         preferred_element_type=jnp.float32)          # (B, 3H)
            r = jax.nn.sigmoid(gi[:, 0:H] + gh[:, 0:H])
            z = jax.nn.sigmoid(gi[:, H:2 * H] + gh[:, H:2 * H])
            n = jnp.tanh(gi[:, 2 * H:] + r * (gh[:, 2 * H:] + b_hn))
            return n + z * (h - n)

        h = jax.lax.fori_loop(0, tt, step, h_ref[...], unroll=unroll)
        h_ref[...] = h

        @pl.when(chunk == pl.num_programs(0) - 1)
        def _epilogue():
            out = jnp.dot(h, w_fc_ref[...],
                          preferred_element_type=jnp.float32) + b_fc_ref[...]
            out_ref[...] = out.astype(out_ref.dtype)

    return kernel


def _pick_time_chunk(T, B, H, budget_bytes=8 * 1024 * 1024):
    """Largest divisor of T whose (tt, B, 3H) f32 chunk fits the per-buffer budget
    (two buffers then stay well under v7x's 64 MiB physical / 32 MiB scoped VMEM)."""
    row_bytes = B * 3 * H * 4
    tt = max(1, min(T, budget_bytes // max(row_bytes, 1)))
    while T % tt:
        tt -= 1
    return tt


def event_model_forward(x_ids, params, *, time_chunk=None):
    """x_ids: (B, T) int32 token ids. Returns (B, output_size) float32."""
    emb_table = params["embedding"]               # (V, H)
    w_ih_t = params["w_ih_t"]                     # (H, 3H)  [r|z|n] columns
    w_hh_t = params["w_hh_t"]                     # (H, 3H)
    b_ih = params["b_ih"][0]                      # (3H,)
    b_hh = params["b_hh"][0]                      # (3H,)
    w_fc_t = params["w_fc_t"]                     # (H, O)
    b_fc = params["b_fc"]                         # (1, O)

    B, T = x_ids.shape
    V, H = emb_table.shape
    O = w_fc_t.shape[1]

    # --- Glue (plain JAX) ----------------------------------------------------
    # Fold Embedding -> input projection -> (r/z) biases into ONE (V, 3H) table;
    # the per-token work becomes a gather.  b_hh_n is excluded: it must stay
    # inside r * (h @ W_hn + b_hn).
    bias_fold = jnp.concatenate([b_ih[:2 * H] + b_hh[:2 * H], b_ih[2 * H:]])
    proj_table = jnp.dot(emb_table, w_ih_t,
                         precision=jax.lax.Precision.HIGHEST) + bias_fold  # (V,3H)
    gi = jnp.take(proj_table, x_ids.T, axis=0)    # (T, B, 3H), time-major

    b_hn = b_hh[2 * H:].reshape(1, H)

    # --- Kernel launch --------------------------------------------------------
    tt = time_chunk if time_chunk is not None else _pick_time_chunk(T, B, H)
    assert T % tt == 0
    n_chunks = T // tt

    hoist_weights = (3 * H * H * 4) <= 16 * 4096   # W_hh in vregs only while small
    unroll = True if tt <= 8 else 8

    kernel = _make_gru_fc_kernel(tt, H, hoist_weights, unroll)

    # VMEM budget: double-buffered gi chunk + (double-buffered) constants + out.
    elt = 4
    gi_chunk_bytes = tt * B * 3 * H * elt
    const_bytes = (H * 3 * H + H + H * O + O) * elt
    vmem_limit = 2 * (gi_chunk_bytes + const_bytes + B * O * elt) \
        + B * H * elt + (2 << 20)
    vmem_limit = int(max(vmem_limit, 4 * 1024 * 1024))

    def full(shape):
        return pl.BlockSpec(shape, lambda t: tuple(0 for _ in shape))

    out = pl.pallas_call(
        kernel,
        out_shape=jax.ShapeDtypeStruct((B, O), jnp.float32),
        grid=(n_chunks,),
        in_specs=[
            pl.BlockSpec((tt, B, 3 * H), lambda t: (t, 0, 0)),   # gi (streamed)
            full((H, 3 * H)),                                    # w_hh
            full((1, H)),                                        # b_hn
            full((H, O)),                                        # w_fc
            full((1, O)),                                        # b_fc
        ],
        out_specs=pl.BlockSpec((B, O), lambda t: (0, 0)),
        scratch_shapes=[pltpu.VMEM((B, H), jnp.float32)],        # persistent h
        compiler_params=pltpu.CompilerParams(
            dimension_semantics=("arbitrary",),
            vmem_limit_bytes=vmem_limit),
    )(gi, w_hh_t, b_hn, w_fc_t, b_fc)
    return out


def reference_forward(x_ids, params):
    """Pure-JAX reference (matches PyTorch GRU equations, h0 = 0)."""
    emb = jnp.take(params["embedding"], x_ids, axis=0)   # (B, T, H)
    H = emb.shape[-1]
    w_ih_t, w_hh_t = params["w_ih_t"], params["w_hh_t"]
    b_ih, b_hh = params["b_ih"][0], params["b_hh"][0]
    hi = jax.lax.Precision.HIGHEST

    def step(h, x_t):
        gi = jnp.dot(x_t, w_ih_t, precision=hi) + b_ih
        gh = jnp.dot(h, w_hh_t, precision=hi) + b_hh
        i_r, i_z, i_n = jnp.split(gi, 3, axis=-1)
        h_r, h_z, h_n = jnp.split(gh, 3, axis=-1)
        r = jax.nn.sigmoid(i_r + h_r)
        z = jax.nn.sigmoid(i_z + h_z)
        n = jnp.tanh(i_n + r * h_n)
        h_new = (1.0 - z) * n + z * h
        return h_new, None

    h0 = jnp.zeros((x_ids.shape[0], H), jnp.float32)
    h_last, _ = jax.lax.scan(step, h0, jnp.transpose(emb, (1, 0, 2)))
    return jnp.dot(h_last, params["w_fc_t"], precision=hi) + params["b_fc"][0]


def init_params(key, input_size, hidden_size, output_size):
    ks = jax.random.split(key, 7)
    H, V, O = hidden_size, input_size, output_size
    bound = 1.0 / jnp.sqrt(H)
    u = lambda k, shp: jax.random.uniform(k, shp, jnp.float32, -bound, bound)
    return {
        "embedding": jax.random.normal(ks[0], (V, H), jnp.float32),
        "w_ih_t": u(ks[1], (H, 3 * H)),   # transpose of PyTorch weight_ih_l0 (3H, H)
        "w_hh_t": u(ks[2], (H, 3 * H)),   # transpose of PyTorch weight_hh_l0 (3H, H)
        "b_ih": u(ks[3], (1, 3 * H)),
        "b_hh": u(ks[4], (1, 3 * H)),
        "w_fc_t": u(ks[5], (H, O)),       # transpose of PyTorch fc.weight (O, H)
        "b_fc": u(ks[6], (1, O)),
    }


if __name__ == "__main__":
    input_size = 16      # vocab size
    hidden_size = 32
    output_size = 8
    B, T = 2, 8

    key = jax.random.PRNGKey(0)
    k_param, k_x = jax.random.split(key)
    params = init_params(k_param, input_size, hidden_size, output_size)
    x = jax.random.randint(k_x, (B, T), 0, input_size, dtype=jnp.int32)

    # time_chunk=4 -> 2 grid steps: exercises the streamed-gi / persistent-h
    # / pl.when init+epilogue path (default picker would use one chunk here).
    out = event_model_forward(x, params, time_chunk=4)
    out = jax.block_until_ready(out)

    ref = reference_forward(x, params)
    assert out.shape == (B, output_size)
    assert jnp.allclose(out, ref, atol=1e-5, rtol=1e-5), "mismatch vs reference"
    print("KERNEL_OK")
</pallas_src>

<mosaic_0001>
module attributes {stable_mosaic.version = 11 : i64} {
  func.func @kernel(%arg0: i32, %arg1: memref<4x2x96xf32, #tpu.memory_space<vmem>>, %arg2: memref<32x96xf32, #tpu.memory_space<vmem>>, %arg3: memref<1x32xf32, #tpu.memory_space<vmem>>, %arg4: memref<32x8xf32, #tpu.memory_space<vmem>>, %arg5: memref<1x8xf32, #tpu.memory_space<vmem>>, %arg6: memref<2x8xf32, #tpu.memory_space<vmem>>, %arg7: memref<2x32xf32, #tpu.memory_space<vmem>>) attributes {dimension_semantics = [#tpu.dimension_semantics<arbitrary>], iteration_bounds = array<i64: 2>, scalar_prefetch = 0 : i64, scratch_operands = 1 : i64, tpu.core_type = #tpu.core_type<tc>, window_params = [{transform_indices = @transform_0, window_bounds = array<i64: 4, 2, 96>}, {pipeline_mode = #tpu.pipeline_mode<synchronous>, transform_indices = @transform_1, window_bounds = array<i64: 32, 96>}, {pipeline_mode = #tpu.pipeline_mode<synchronous>, transform_indices = @transform_2, window_bounds = array<i64: 1, 32>}, {pipeline_mode = #tpu.pipeline_mode<synchronous>, transform_indices = @transform_3, window_bounds = array<i64: 32, 8>}, {pipeline_mode = #tpu.pipeline_mode<synchronous>, transform_indices = @transform_4, window_bounds = array<i64: 1, 8>}, {pipeline_mode = #tpu.pipeline_mode<synchronous>, transform_indices = @transform_5, window_bounds = array<i64: 2, 8>}]} {
    %c0_i32 = arith.constant 0 : i32
    %0 = arith.cmpi eq, %arg0, %c0_i32 : i32
    %1 = arith.extui %0 : i1 to i32
    %c0_i32_0 = arith.constant 0 : i32
    %2 = arith.cmpi ne, %1, %c0_i32_0 : i32
    scf.if %2 {
      %cst_30 = arith.constant 0.000000e+00 : f32
      %130 = vector.broadcast %cst_30 : f32 to vector<2x32xf32>
      %c0_31 = arith.constant 0 : index
      %c0_32 = arith.constant 0 : index
      %131 = vector.load %arg7[%c0_31, %c0_32] : memref<2x32xf32, #tpu.memory_space<vmem>>, vector<2x32xf32>
      tpu.vector_store %arg7[%c0_31, %c0_32], %130 {strides = array<i32>} : memref<2x32xf32, #tpu.memory_space<vmem>>, vector<2x32xf32>,
    } else {
    }
    %c0 = arith.constant 0 : index
    %c0_1 = arith.constant 0 : index
    %3 = vector.load %arg3[%c0, %c0_1] : memref<1x32xf32, #tpu.memory_space<vmem>>, vector<1x32xf32>
    %c0_2 = arith.constant 0 : index
    %c0_3 = arith.constant 0 : index
    %4 = vector.load %arg2[%c0_2, %c0_3] : memref<32x96xf32, #tpu.memory_space<vmem>>, vector<32x96xf32>
    %c0_4 = arith.constant 0 : index
    %c0_5 = arith.constant 0 : index
    %5 = vector.load %arg7[%c0_4, %c0_5] : memref<2x32xf32, #tpu.memory_space<vmem>>, vector<2x32xf32>
    %c0_i32_6 = arith.constant 0 : i32
    %6 = arith.index_cast %c0_i32_6 : i32 to index
    %c0_7 = arith.constant 0 : index
    %c0_8 = arith.constant 0 : index
    %7 = vector.load %arg1[%6, %c0_7, %c0_8] : memref<4x2x96xf32, #tpu.memory_space<vmem>>, vector<1x2x96xf32>
    %8 = vector.shape_cast %7 : vector<1x2x96xf32> to vector<2x96xf32>
    %cst = arith.constant dense<0.000000e+00> : vector<2x96xf32>
    %9 = tpu.matmul %5, %4, %cst {dimension_numbers = #tpu.dot_dimension_numbers<[1], [0], [0], [1], [0, 0, 1, 1], [], []>} : vector<2x32xf32>, vector<32x96xf32>, vector<2x96xf32> -> vector<2x96xf32>
    %10 = vector.extract_strided_slice %8 {offsets = [0, 0], sizes = [2, 32], strides = [1, 1]} : vector<2x96xf32> to vector<2x32xf32>
    %11 = vector.extract_strided_slice %9 {offsets = [0, 0], sizes = [2, 32], strides = [1, 1]} : vector<2x96xf32> to vector<2x32xf32>
    %12 = arith.addf %10, %11 : vector<2x32xf32>
    %13 = arith.negf %12 : vector<2x32xf32>
    %14 = math.exp %13 : vector<2x32xf32>
    %cst_9 = arith.constant 1.000000e+00 : f32
    %15 = vector.broadcast %cst_9 : f32 to vector<2x32xf32>
    %16 = arith.addf %15, %14 : vector<2x32xf32>
    %17 = arith.divf %15, %16 : vector<2x32xf32>
    %18 = vector.extract_strided_slice %8 {offsets = [0, 32], sizes = [2, 32], strides = [1, 1]} : vector<2x96xf32> to vector<2x32xf32>
    %19 = vector.extract_strided_slice %9 {offsets = [0, 32], sizes = [2, 32], strides = [1, 1]} : vector<2x96xf32> to vector<2x32xf32>
    %20 = arith.addf %18, %19 : vector<2x32xf32>
    %21 = arith.negf %20 : vector<2x32xf32>
    %22 = math.exp %21 : vector<2x32xf32>
    %cst_10 = arith.constant 1.000000e+00 : f32
    %23 = vector.broadcast %cst_10 : f32 to vector<2x32xf32>
    %24 = arith.addf %23, %22 : vector<2x32xf32>
    %25 = arith.divf %23, %24 : vector<2x32xf32>
    %26 = vector.extract_strided_slice %8 {offsets = [0, 64], sizes = [2, 32], strides = [1, 1]} : vector<2x96xf32> to vector<2x32xf32>
    %27 = vector.extract_strided_slice %9 {offsets = [0, 64], sizes = [2, 32], strides = [1, 1]} : vector<2x96xf32> to vector<2x32xf32>
    %28 = vector.broadcast %3 : vector<1x32xf32> to vector<2x32xf32>
    %29 = arith.addf %27, %28 : vector<2x32xf32>
    %30 = arith.mulf %17, %29 : vector<2x32xf32>
    %31 = arith.addf %26, %30 : vector<2x32xf32>
    %32 = math.tanh %31 : vector<2x32xf32>
    %33 = arith.subf %5, %32 : vector<2x32xf32>
    %34 = arith.mulf %25, %33 : vector<2x32xf32>
    %35 = arith.addf %32, %34 : vector<2x32xf32>
    %c1_i32 = arith.constant 1 : i32
    %36 = arith.index_cast %c1_i32 : i32 to index
    %c0_11 = arith.constant 0 : index
    %c0_12 = arith.constant 0 : index
    %37 = vector.load %arg1[%36, %c0_11, %c0_12] : memref<4x2x96xf32, #tpu.memory_space<vmem>>, vector<1x2x96xf32>
    %38 = vector.shape_cast %37 : vector<1x2x96xf32> to vector<2x96xf32>
    %cst_13 = arith.constant dense<0.000000e+00> : vector<2x96xf32>
    %39 = tpu.matmul %35, %4, %cst_13 {dimension_numbers = #tpu.dot_dimension_numbers<[1], [0], [0], [1], [0, 0, 1, 1], [], []>} : vector<2x32xf32>, vector<32x96xf32>, vector<2x96xf32> -> vector<2x96xf32>
    %40 = vector.extract_strided_slice %38 {offsets = [0, 0], sizes = [2, 32], strides = [1, 1]} : vector<2x96xf32> to vector<2x32xf32>
    %41 = vector.extract_strided_slice %39 {offsets = [0, 0], sizes = [2, 32], strides = [1, 1]} : vector<2x96xf32> to vector<2x32xf32>
    %42 = arith.addf %40, %41 : vector<2x32xf32>
    %43 = arith.negf %42 : vector<2x32xf32>
    %44 = math.exp %43 : vector<2x32xf32>
    %cst_14 = arith.constant 1.000000e+00 : f32
    %45 = vector.broadcast %cst_14 : f32 to vector<2x32xf32>
    %46 = arith.addf %45, %44 : vector<2x32xf32>
    %47 = arith.divf %45, %46 : vector<2x32xf32>
    %48 = vector.extract_strided_slice %38 {offsets = [0, 32], sizes = [2, 32], strides = [1, 1]} : vector<2x96xf32> to vector<2x32xf32>
    %49 = vector.extract_strided_slice %39 {offsets = [0, 32], sizes = [2, 32], strides = [1, 1]} : vector<2x96xf32> to vector<2x32xf32>
    %50 = arith.addf %48, %49 : vector<2x32xf32>
    %51 = arith.negf %50 : vector<2x32xf32>
    %52 = math.exp %51 : vector<2x32xf32>
    %cst_15 = arith.constant 1.000000e+00 : f32
    %53 = vector.broadcast %cst_15 : f32 to vector<2x32xf32>
    %54 = arith.addf %53, %52 : vector<2x32xf32>
    %55 = arith.divf %53, %54 : vector<2x32xf32>
    %56 = vector.extract_strided_slice %38 {offsets = [0, 64], sizes = [2, 32], strides = [1, 1]} : vector<2x96xf32> to vector<2x32xf32>
    %57 = vector.extract_strided_slice %39 {offsets = [0, 64], sizes = [2, 32], strides = [1, 1]} : vector<2x96xf32> to vector<2x32xf32>
    %58 = vector.broadcast %3 : vector<1x32xf32> to vector<2x32xf32>
    %59 = arith.addf %57, %58 : vector<2x32xf32>
    %60 = arith.mulf %47, %59 : vector<2x32xf32>
    %61 = arith.addf %56, %60 : vector<2x32xf32>
    %62 = math.tanh %61 : vector<2x32xf32>
    %63 = arith.subf %35, %62 : vector<2x32xf32>
    %64 = arith.mulf %55, %63 : vector<2x32xf32>
    %65 = arith.addf %62, %64 : vector<2x32xf32>
    %c2_i32 = arith.constant 2 : i32
    %66 = arith.index_cast %c2_i32 : i32 to index
    %c0_16 = arith.constant 0 : index
    %c0_17 = arith.constant 0 : index
    %67 = vector.load %arg1[%66, %c0_16, %c0_17] : memref<4x2x96xf32, #tpu.memory_space<vmem>>, vector<1x2x96xf32>
    %68 = vector.shape_cast %67 : vector<1x2x96xf32> to vector<2x96xf32>
    %cst_18 = arith.constant dense<0.000000e+00> : vector<2x96xf32>
    %69 = tpu.matmul %65, %4, %cst_18 {dimension_numbers = #tpu.dot_dimension_numbers<[1], [0], [0], [1], [0, 0, 1, 1], [], []>} : vector<2x32xf32>, vector<32x96xf32>, vector<2x96xf32> -> vector<2x96xf32>
    %70 = vector.extract_strided_slice %68 {offsets = [0, 0], sizes = [2, 32], strides = [1, 1]} : vector<2x96xf32> to vector<2x32xf32>
    %71 = vector.extract_strided_slice %69 {offsets = [0, 0], sizes = [2, 32], strides = [1, 1]} : vector<2x96xf32> to vector<2x32xf32>
    %72 = arith.addf %70, %71 : vector<2x32xf32>
    %73 = arith.negf %72 : vector<2x32xf32>
    %74 = math.exp %73 : vector<2x32xf32>
    %cst_19 = arith.constant 1.000000e+00 : f32
    %75 = vector.broadcast %cst_19 : f32 to vector<2x32xf32>
    %76 = arith.addf %75, %74 : vector<2x32xf32>
    %77 = arith.divf %75, %76 : vector<2x32xf32>
    %78 = vector.extract_strided_slice %68 {offsets = [0, 32], sizes = [2, 32], strides = [1, 1]} : vector<2x96xf32> to vector<2x32xf32>
    %79 = vector.extract_strided_slice %69 {offsets = [0, 32], sizes = [2, 32], strides = [1, 1]} : vector<2x96xf32> to vector<2x32xf32>
    %80 = arith.addf %78, %79 : vector<2x32xf32>
    %81 = arith.negf %80 : vector<2x32xf32>
    %82 = math.exp %81 : vector<2x32xf32>
    %cst_20 = arith.constant 1.000000e+00 : f32
    %83 = vector.broadcast %cst_20 : f32 to vector<2x32xf32>
    %84 = arith.addf %83, %82 : vector<2x32xf32>
    %85 = arith.divf %83, %84 : vector<2x32xf32>
    %86 = vector.extract_strided_slice %68 {offsets = [0, 64], sizes = [2, 32], strides = [1, 1]} : vector<2x96xf32> to vector<2x32xf32>
    %87 = vector.extract_strided_slice %69 {offsets = [0, 64], sizes = [2, 32], strides = [1, 1]} : vector<2x96xf32> to vector<2x32xf32>
    %88 = vector.broadcast %3 : vector<1x32xf32> to vector<2x32xf32>
    %89 = arith.addf %87, %88 : vector<2x32xf32>
    %90 = arith.mulf %77, %89 : vector<2x32xf32>
    %91 = arith.addf %86, %90 : vector<2x32xf32>
    %92 = math.tanh %91 : vector<2x32xf32>
    %93 = arith.subf %65, %92 : vector<2x32xf32>
    %94 = arith.mulf %85, %93 : vector<2x32xf32>
    %95 = arith.addf %92, %94 : vector<2x32xf32>
    %c3_i32 = arith.constant 3 : i32
    %96 = arith.index_cast %c3_i32 : i32 to index
    %c0_21 = arith.constant 0 : index
    %c0_22 = arith.constant 0 : index
    %97 = vector.load %arg1[%96, %c0_21, %c0_22] : memref<4x2x96xf32, #tpu.memory_space<vmem>>, vector<1x2x96xf32>
    %98 = vector.shape_cast %97 : vector<1x2x96xf32> to vector<2x96xf32>
    %cst_23 = arith.constant dense<0.000000e+00> : vector<2x96xf32>
    %99 = tpu.matmul %95, %4, %cst_23 {dimension_numbers = #tpu.dot_dimension_numbers<[1], [0], [0], [1], [0, 0, 1, 1], [], []>} : vector<2x32xf32>, vector<32x96xf32>, vector<2x96xf32> -> vector<2x96xf32>
    %100 = vector.extract_strided_slice %98 {offsets = [0, 0], sizes = [2, 32], strides = [1, 1]} : vector<2x96xf32> to vector<2x32xf32>
    %101 = vector.extract_strided_slice %99 {offsets = [0, 0], sizes = [2, 32], strides = [1, 1]} : vector<2x96xf32> to vector<2x32xf32>
    %102 = arith.addf %100, %101 : vector<2x32xf32>
    %103 = arith.negf %102 : vector<2x32xf32>
    %104 = math.exp %103 : vector<2x32xf32>
    %cst_24 = arith.constant 1.000000e+00 : f32
    %105 = vector.broadcast %cst_24 : f32 to vector<2x32xf32>
    %106 = arith.addf %105, %104 : vector<2x32xf32>
    %107 = arith.divf %105, %106 : vector<2x32xf32>
    %108 = vector.extract_strided_slice %98 {offsets = [0, 32], sizes = [2, 32], strides = [1, 1]} : vector<2x96xf32> to vector<2x32xf32>
    %109 = vector.extract_strided_slice %99 {offsets = [0, 32], sizes = [2, 32], strides = [1, 1]} : vector<2x96xf32> to vector<2x32xf32>
    %110 = arith.addf %108, %109 : vector<2x32xf32>
    %111 = arith.negf %110 : vector<2x32xf32>
    %112 = math.exp %111 : vector<2x32xf32>
    %cst_25 = arith.constant 1.000000e+00 : f32
    %113 = vector.broadcast %cst_25 : f32 to vector<2x32xf32>
    %114 = arith.addf %113, %112 : vector<2x32xf32>
    %115 = arith.divf %113, %114 : vector<2x32xf32>
    %116 = vector.extract_strided_slice %98 {offsets = [0, 64], sizes = [2, 32], strides = [1, 1]} : vector<2x96xf32> to vector<2x32xf32>
    %117 = vector.extract_strided_slice %99 {offsets = [0, 64], sizes = [2, 32], strides = [1, 1]} : vector<2x96xf32> to vector<2x32xf32>
    %118 = vector.broadcast %3 : vector<1x32xf32> to vector<2x32xf32>
    %119 = arith.addf %117, %118 : vector<2x32xf32>
    %120 = arith.mulf %107, %119 : vector<2x32xf32>
    %121 = arith.addf %116, %120 : vector<2x32xf32>
    %122 = math.tanh %121 : vector<2x32xf32>
    %123 = arith.subf %95, %122 : vector<2x32xf32>
    %124 = arith.mulf %115, %123 : vector<2x32xf32>
    %125 = arith.addf %122, %124 : vector<2x32xf32>
    %c4_i32 = arith.constant 4 : i32
    %c0_26 = arith.constant 0 : index
    %c0_27 = arith.constant 0 : index
    %126 = vector.load %arg7[%c0_26, %c0_27] : memref<2x32xf32, #tpu.memory_space<vmem>>, vector<2x32xf32>
    tpu.vector_store %arg7[%c0_26, %c0_27], %125 {strides = array<i32>} : memref<2x32xf32, #tpu.memory_space<vmem>>, vector<2x32xf32>,
    %c1_i32_28 = arith.constant 1 : i32
    %127 = arith.cmpi eq, %arg0, %c1_i32_28 : i32
    %128 = arith.extui %127 : i1 to i32
    %c0_i32_29 = arith.constant 0 : i32
    %129 = arith.cmpi ne, %128, %c0_i32_29 : i32
    scf.if %129 {
      %c0_30 = arith.constant 0 : index
      %c0_31 = arith.constant 0 : index
      %130 = vector.load %arg4[%c0_30, %c0_31] : memref<32x8xf32, #tpu.memory_space<vmem>>, vector<32x8xf32>
      %cst_32 = arith.constant dense<0.000000e+00> : vector<2x8xf32>
      %131 = tpu.matmul %125, %130, %cst_32 {dimension_numbers = #tpu.dot_dimension_numbers<[1], [0], [0], [1], [0, 0, 1, 1], [], []>} : vector<2x32xf32>, vector<32x8xf32>, vector<2x8xf32> -> vector<2x8xf32>
      %c0_33 = arith.constant 0 : index
      %c0_34 = arith.constant 0 : index
      %132 = vector.load %arg5[%c0_33, %c0_34] : memref<1x8xf32, #tpu.memory_space<vmem>>, vector<1x8xf32>
      %133 = vector.broadcast %132 : vector<1x8xf32> to vector<2x8xf32>
      %134 = arith.addf %131, %133 : vector<2x8xf32>
      %c0_35 = arith.constant 0 : index
      %c0_36 = arith.constant 0 : index
      %135 = vector.load %arg6[%c0_35, %c0_36] : memref<2x8xf32, #tpu.memory_space<vmem>>, vector<2x8xf32>
      tpu.vector_store %arg6[%c0_35, %c0_36], %134 {strides = array<i32>} : memref<2x8xf32, #tpu.memory_space<vmem>>, vector<2x8xf32>,
    } else {
    }
    return
  }
  func.func @transform_0(%arg0: i32) -> (i32, i32, i32) {
    %c0_i32 = arith.constant 0 : i32
    %c0_i32_0 = arith.constant 0 : i32
    %c0_i32_1 = arith.constant 0 : i32
    return %arg0, %c0_i32, %c0_i32_0 : i32, i32, i32
  }
  func.func @transform_1(%arg0: i32) -> (i32, i32) {
    %c0_i32 = arith.constant 0 : i32
    %c0_i32_0 = arith.constant 0 : i32
    %c0_i32_1 = arith.constant 0 : i32
    return %c0_i32, %c0_i32_0 : i32, i32
  }
  func.func @transform_2(%arg0: i32) -> (i32, i32) {
    %c0_i32 = arith.constant 0 : i32
    %c0_i32_0 = arith.constant 0 : i32
    %c0_i32_1 = arith.constant 0 : i32
    return %c0_i32, %c0_i32_0 : i32, i32
  }
  func.func @transform_3(%arg0: i32) -> (i32, i32) {
    %c0_i32 = arith.constant 0 : i32
    %c0_i32_0 = arith.constant 0 : i32
    %c0_i32_1 = arith.constant 0 : i32
    return %c0_i32, %c0_i32_0 : i32, i32
  }
  func.func @transform_4(%arg0: i32) -> (i32, i32) {
    %c0_i32 = arith.constant 0 : i32
    %c0_i32_0 = arith.constant 0 : i32
    %c0_i32_1 = arith.constant 0 : i32
    return %c0_i32, %c0_i32_0 : i32, i32
  }
  func.func @transform_5(%arg0: i32) -> (i32, i32) {
    %c0_i32 = arith.constant 0 : i32
    %c0_i32_0 = arith.constant 0 : i32
    %c0_i32_1 = arith.constant 0 : i32
    return %c0_i32, %c0_i32_0 : i32, i32
  }
}

</mosaic_0001>

<llo_original>
// kernel: tpu_custom_call.1
$region0: #{tpu_custom_call.1}
  #allocation0 [shape = 'u32[]', space=smem, size = 0x4, offset = 0x4, fixed_abs, tag = 'smem constant byte address 0x4 - core index']
  #allocation1 [shape = 'u32[72,128]{1,0:T(1,128)}', space=vmem, size = 0x9000, scoped, tag = 'internal scratch']
  #allocation2 [shape = 'f32[2,32]{1,0:T(2,128)}', space=vmem, size = 0x400, scoped, tag = 'scratch operand']
  %s0 = inlined_call_operand.hbm [shape: f32[8,2,96], index: 0, kind: input, shape index: {}]
  %s1 = inlined_call_operand.vmem [shape: f32[32,96], index: 1, kind: input, shape index: {}]
  %s2 = inlined_call_operand.vmem [shape: f32[1,32], index: 2, kind: input, shape index: {}]
  %s3 = inlined_call_operand.vmem [shape: f32[32,8], index: 3, kind: input, shape index: {}]
  %s4 = inlined_call_operand.vmem [shape: f32[1,8], index: 4, kind: input, shape index: {}]
  %s5 = inlined_call_operand.hbm [shape: f32[2,8], index: 5, kind: output, shape index: {}]
  %s6 = sld [smem:[#allocation0]]
  $region65: #{tpu_custom_call.1} parent=0
    _
  %s8 = ssub.s32 1, %s6
  %s9 = scalar_select 0, %s8, %s6
  $region1: #{tpu_custom_call.1} parent=0
    #allocation3 [shape = 'u8[8192]{0}', space=vmem, size = 0x2000, scoped, tag = 'input window, operand 0']
    #allocation4 [shape = 's32[2]{0}', space=sflag, size = 0x8, scoped, tag = 'scoped memory for tpu_custom_call.1']
    #allocation5 [shape = 's32[2]{0}', space=sflag, size = 0x8, scoped, tag = 'scoped memory for tpu_custom_call.1']
    #allocation6 [shape = 'u8[1024]{0}', space=vmem, size = 0x400, scoped, tag = 'output window, operand 0, single buffered']
    %10 = vsyncpa [#allocation4], 0
    %s11 = scalar_lea.sflag [#allocation4], 1
    %12 = vsyncpa %s11, 0
    %13 = vsyncpa [#allocation5], 0
    loop: start=0, step=1, limit=4
    $region2: #{tpu_custom_call.1} parent=1 // loop_pre_header
      _
    $region3: #{tpu_custom_call.1} parent=1 // loop_header
      %s15 = sphi 0, %s19
      %p16 = scmp.ge.s32.totalorder %s15, 4
      %s25 = sphi 0, %s27
      %s28 = sphi 0, %s25
      %s29 = sphi 0, %s28
      %s45 = sphi 0, %s29
      %s49 = sphi 0, %s49
      %s51 = sphi 0, %s49
      %s52 = sphi 0, %s51
      %s66 = sphi 0, %s52
      %s70 = sphi 0, %s70
      %s72 = sphi 0, %s70
      %s73 = sphi 0, %s72
      %s87 = sphi 0, %s73
      %s91 = sphi 0, %s91
      %s93 = sphi 0, %s91
      %s94 = sphi 0, %s93
      %s108 = sphi 0, %s94
      %s112 = sphi 0, %s112
      %s114 = sphi 0, %s112
      %s115 = sphi 0, %s114
      %s129 = sphi 0, %s115
      %s133 = sphi 0, %s133
      %s135 = sphi 0, %s133
      %s136 = sphi 0, %s135
      %s150 = sphi 0, %s136
    $region4: #{tpu_custom_call.1} parent=1 // loop_header_branch
      %18 = sbr.rel (%p16) target = $region8
    $region5: #{tpu_custom_call.1} parent=1 // loop_body
      %s20 = ssub.s32 %s15, 1
      %s21 = ssub.s32 %s15, 2
      %s22 = sadd.s32 %s15, 1
      %s23 = ssub.s32 %s15, %s22
      %p24 = scmp.eq.s32.totalorder %s23, 0
      %s26 = sadd.s32 %s25, 1
      %s27 = scalar_select %p24, %s25, %s26
      %p30 = pneg %p24
      %p31 = scmp.eq.s32.totalorder %s15, 1
      %p32 = por %p30, %p31
      %p33 = scmp.ne.s32.totalorder %s25, %s28
      %p34 = scmp.eq.s32.totalorder %s15, 0
      %p35 = por %p33, %p34
      %p36 = scmp.ne.s32.totalorder %s25, %s28
      %p37 = scmp.eq.s32.totalorder %s20, 1
      %p38 = por %p36, %p37
      %p39 = scmp.ne.s32.totalorder %s28, %s29
      %p40 = scmp.eq.s32.totalorder %s20, 0
      %p41 = por %p39, %p40
      %p42 = scmp.ne.s32.totalorder %s28, %s29
      %p43 = scmp.eq.s32.totalorder %s21, 1
      %p44 = por %p42, %p43
      %p46 = scmp.ne.s32.totalorder %s29, %s45
      %p47 = scmp.eq.s32.totalorder %s21, 0
      %p48 = por %p46, %p47
      %s50 = sadd.s32 %s49, 1
      %p53 = scmp.eq.s32.totalorder %s15, 1
      %p54 = scmp.ne.s32.totalorder %s49, %s51
      %p55 = scmp.eq.s32.totalorder %s15, 0
      %p56 = por %p54, %p55
      %p57 = scmp.ne.s32.totalorder %s49, %s51
      %p58 = scmp.eq.s32.totalorder %s20, 1
      %p59 = por %p57, %p58
      %p60 = scmp.ne.s32.totalorder %s51, %s52
      %p61 = scmp.eq.s32.totalorder %s20, 0
      %p62 = por %p60, %p61
      %p63 = scmp.ne.s32.totalorder %s51, %s52
      %p64 = scmp.eq.s32.totalorder %s21, 1
      %p65 = por %p63, %p64
      %p67 = scmp.ne.s32.totalorder %s52, %s66
      %p68 = scmp.eq.s32.totalorder %s21, 0
      %p69 = por %p67, %p68
      %s71 = sadd.s32 %s70, 1
      %p74 = scmp.eq.s32.totalorder %s15, 1
      %p75 = scmp.ne.s32.totalorder %s70, %s72
      %p76 = scmp.eq.s32.totalorder %s15, 0
      %p77 = por %p75, %p76
      %p78 = scmp.ne.s32.totalorder %s70, %s72
      %p79 = scmp.eq.s32.totalorder %s20, 1
      %p80 = por %p78, %p79
      %p81 = scmp.ne.s32.totalorder %s72, %s73
      %p82 = scmp.eq.s32.totalorder %s20, 0
      %p83 = por %p81, %p82
      %p84 = scmp.ne.s32.totalorder %s72, %s73
      %p85 = scmp.eq.s32.totalorder %s21, 1
      %p86 = por %p84, %p85
      %p88 = scmp.ne.s32.totalorder %s73, %s87
      %p89 = scmp.eq.s32.totalorder %s21, 0
      %p90 = por %p88, %p89
      %s92 = sadd.s32 %s91, 1
      %p95 = scmp.eq.s32.totalorder %s15, 1
      %p96 = scmp.ne.s32.totalorder %s91, %s93
      %p97 = scmp.eq.s32.totalorder %s15, 0
      %p98 = por %p96, %p97
      %p99 = scmp.ne.s32.totalorder %s91, %s93
      %p100 = scmp.eq.s32.totalorder %s20, 1
      %p101 = por %p99, %p100
      %p102 = scmp.ne.s32.totalorder %s93, %s94
      %p103 = scmp.eq.s32.totalorder %s20, 0
      %p104 = por %p102, %p103
      %p105 = scmp.ne.s32.totalorder %s93, %s94
      %p106 = scmp.eq.s32.totalorder %s21, 1
      %p107 = por %p105, %p106
      %p109 = scmp.ne.s32.totalorder %s94, %s108
      %p110 = scmp.eq.s32.totalorder %s21, 0
      %p111 = por %p109, %p110
      %s113 = sadd.s32 %s112, 1
      %p116 = scmp.eq.s32.totalorder %s15, 1
      %p117 = scmp.ne.s32.totalorder %s112, %s114
      %p118 = scmp.eq.s32.totalorder %s15, 0
      %p119 = por %p117, %p118
      %p120 = scmp.ne.s32.totalorder %s112, %s114
      %p121 = scmp.eq.s32.totalorder %s20, 1
      %p122 = por %p120, %p121
      %p123 = scmp.ne.s32.totalorder %s114, %s115
      %p124 = scmp.eq.s32.totalorder %s20, 0
      %p125 = por %p123, %p124
      %p126 = scmp.ne.s32.totalorder %s114, %s115
      %p127 = scmp.eq.s32.totalorder %s21, 1
      %p128 = por %p126, %p127
      %p130 = scmp.ne.s32.totalorder %s115, %s129
      %p131 = scmp.eq.s32.totalorder %s21, 0
      %p132 = por %p130, %p131
      %s134 = sadd.s32 %s133, 1
      %p137 = scmp.eq.s32.totalorder %s15, 1
      %p138 = scmp.ne.s32.totalorder %s133, %s135
      %p139 = scmp.eq.s32.totalorder %s15, 0
      %p140 = por %p138, %p139
      %p141 = scmp.ne.s32.totalorder %s133, %s135
      %p142 = scmp.eq.s32.totalorder %s20, 1
      %p143 = por %p141, %p142
      %p144 = scmp.ne.s32.totalorder %s135, %s136
      %p145 = scmp.eq.s32.totalorder %s20, 0
      %p146 = por %p144, %p145
      %p147 = scmp.ne.s32.totalorder %s135, %s136
      %p148 = scmp.eq.s32.totalorder %s21, 1
      %p149 = por %p147, %p148
      %p151 = scmp.ne.s32.totalorder %s136, %s150
      %p152 = scmp.eq.s32.totalorder %s21, 0
      %p153 = por %p151, %p152
      %p154 = scmp.le.s32.totalorder 1, %s15
      %p155 = scmp.lt.s32.totalorder %s15, 3
      %p156 = pnand %p154, %p155
      %p157 = pneg %p156
      // Predicated region
      $region9: #{tpu_custom_call.1} parent=5 // pred_check
        _
      $region10: #{tpu_custom_call.1} parent=5 // pred_check_branch
        %159 = sbr.rel (%p156) target = $region12
      $region11: #{tpu_custom_call.1} parent=5 // pred_region
        %s160 = ssub.s32 %s15, 1
        // Predicated region
        $region13: #{tpu_custom_call.1} parent=11 // pred_check
          %p161 = pneg %p62
        $region14: #{tpu_custom_call.1} parent=11 // pred_check_branch
          %163 = sbr.rel (%p161) target = $region16
        $region15: #{tpu_custom_call.1} parent=11 // pred_region
          _
        $region16: #{tpu_custom_call.1} parent=11 // pred_fallthru
          _
        // Predicated region
        $region17: #{tpu_custom_call.1} parent=11 // pred_check
          %p164 = pneg %p83
        $region18: #{tpu_custom_call.1} parent=11 // pred_check_branch
          %166 = sbr.rel (%p164) target = $region20
        $region19: #{tpu_custom_call.1} parent=11 // pred_region
          _
        $region20: #{tpu_custom_call.1} parent=11 // pred_fallthru
          _
        // Predicated region
        $region21: #{tpu_custom_call.1} parent=11 // pred_check
          %p167 = pneg %p104
        $region22: #{tpu_custom_call.1} parent=11 // pred_check_branch
          %169 = sbr.rel (%p167) target = $region24
        $region23: #{tpu_custom_call.1} parent=11 // pred_region
          _
        $region24: #{tpu_custom_call.1} parent=11 // pred_fallthru
          _
        // Predicated region
        $region25: #{tpu_custom_call.1} parent=11 // pred_check
          %p170 = pneg %p125
        $region26: #{tpu_custom_call.1} parent=11 // pred_check_branch
          %172 = sbr.rel (%p170) target = $region28
        $region27: #{tpu_custom_call.1} parent=11 // pred_region
          _
        $region28: #{tpu_custom_call.1} parent=11 // pred_fallthru
          _
      $region12: #{tpu_custom_call.1} parent=5 // pred_fallthru
        _
      %p173 = scmp.lt.s32.totalorder %s15, 2
      // Predicated region
      $region29: #{tpu_custom_call.1} parent=5 // pred_check
        %p174 = pneg %p173
      $region30: #{tpu_custom_call.1} parent=5 // pred_check_branch
        %176 = sbr.rel (%p174) target = $region32
      $region31: #{tpu_custom_call.1} parent=5 // pred_region
        // Predicated region
        $region33: #{tpu_custom_call.1} parent=31 // pred_check
          %p177 = pneg %p35
        $region34: #{tpu_custom_call.1} parent=31 // pred_check_branch
          %179 = sbr.rel (%p177) target = $region36
        $region35: #{tpu_custom_call.1} parent=31 // pred_region
          %s180 = sand.u32 %s25, 1
          %s181 = scalar_lea.sflag [#allocation4], %s180
          %s182 = sand.u32 %s25, 1
          %s183 = smul.addr %s182, 8
          %s184 = scalar_lea.vmem [#allocation3], %s183
          %s185 = smul.u32 4, %s15
          %187 = vsyncadd %s181, 0
          %s188 = smul.addr %s185, 2
          %s189 = scalar_lea.hbm %s0, %s188
          %s190 = sshll.u32 %s189, 4
          %s191 = int_to_ptr.hbm [resolvable:$true] %s190
          %s192 = sshll.u32 %s184, 4
          %s193 = int_to_ptr.vmem [resolvable:$true] %s192
          %198 = dma.hbm_to_vmem [thread:$0]  %s191, 128, %s193, %s181, 32, 32, 2
        $region36: #{tpu_custom_call.1} parent=31 // pred_fallthru
          _
      $region32: #{tpu_custom_call.1} parent=5 // pred_fallthru
        _
      %p199 = scmp.le.s32.totalorder 1, %s15
      %p200 = scmp.lt.s32.totalorder %s15, 3
      %p201 = pnand %p199, %p200
      %p202 = pneg %p201
      // Predicated region
      $region37: #{tpu_custom_call.1} parent=5 // pred_check
        _
      $region38: #{tpu_custom_call.1} parent=5 // pred_check_branch
        %204 = sbr.rel (%p201) target = $region40
      $region39: #{tpu_custom_call.1} parent=5 // pred_region
        %s205 = ssub.s32 %s15, 1
        %s206 = sand.u32 %s28, 1
        %s207 = scalar_lea.sflag [#allocation4], %s206
        %s208 = sand.u32 %s28, 1
        %s209 = smul.addr %s208, 8
        %s210 = scalar_lea.vmem [#allocation3], %s209
        // Predicated region
        $region41: #{tpu_custom_call.1} parent=39 // pred_check
          %p211 = pneg %p41
        $region42: #{tpu_custom_call.1} parent=39 // pred_check_branch
          %213 = sbr.rel (%p211) target = $region44
        $region43: #{tpu_custom_call.1} parent=39 // pred_region
          %215 = dma.done %s207, 128
        $region44: #{tpu_custom_call.1} parent=39 // pred_fallthru
          _
        %s216 = sand.u32 %s28, 1
        %s217 = scalar_lea.sflag [#allocation4], %s216
        %s218 = sand.u32 %s28, 1
        %s219 = smul.addr %s218, 8
        %s220 = scalar_lea.vmem [#allocation3], %s219
        %p221 = pneg %p41
        %p222 = pneg %p38
        %p223 = pneg %p62
        %p224 = pneg %p59
        %p225 = pneg %p83
        %p226 = pneg %p80
        %p227 = pneg %p104
        %p228 = pneg %p101
        %p229 = pneg %p125
        %p230 = pneg %p122
        %p231 = pneg %p146
        %p232 = pneg %p143
        %s233 = smul.u32 4, %s20
        %p234 = scmp.eq.s32.totalorder %s20, 0
        // Predicated region
        $region45: #{tpu_custom_call.1} parent=39 // pred_check
          %p235 = pneg %p234
        $region46: #{tpu_custom_call.1} parent=39 // pred_check_branch
          %237 = sbr.rel (%p235) target = $region48
        $region47: #{tpu_custom_call.1} parent=39 // pred_region
          %vm238 = vcmask 254976
          %239 = vst.msk [vmem:[#allocation2] sm:$0x3] %vm238, 0.0
        $region48: #{tpu_custom_call.1} parent=39 // pred_fallthru
          _
        %v240 = vld [vmem:[%s2] sm:$0x1]
        %v241 = vld [vmem:[%s1] sm:$0xff]
        %v242 = vld [vmem:[%s1 + $0x8] sm:$0xff]
        %v243 = vld [vmem:[%s1 + $0x10] sm:$0xff]
        %v244 = vld [vmem:[%s1 + $0x18] sm:$0xff]
        %v245 = vld [vmem:[#allocation2] sm:$0x3]
        %v246 = vld [vmem:[%s210] sm:$0x3]
        %vm247 = vcmask 261120
        %v249 = vsel %vm247, %v245, 0
        %251 = vmatpush.msra.mxu0 0.0
        %252 = vmatpush.msra.mxu0 0.0
        %253 = vmatpush.msra.mxu0 0.0
        %254 = vmatpush.msra.mxu0 0.0
        %255 = vmatpush.msra.mxu0 0.0
        %256 = vmatpush.msra.mxu0 0.0
        %257 = vmatpush.msra.mxu0 0.0
        %258 = vmatpush.msra.mxu0 0.0
        %259 = vmatpush.msra.mxu0 0.0
        %260 = vmatpush.msra.mxu0 0.0
        %261 = vmatpush.msra.mxu0 0.0
        %262 = vmatpush.msra.mxu0 0.0
        %263 = vmatpush.msra.mxu0 %v244
        %264 = vmatpush.msra.mxu0 %v243
        %265 = vmatpush.msra.mxu0 %v242
        %266 = vmatpush.msra.mxu0 %v241
        %267 = vmatmul.f32.gmra.mxu0 %v249
        %v268 = vpop.f32.mrf.mxu0
        %v269 = vadd.f32 0.0, %v268
        %270 = vdwg.mxu0
        %v271 = vadd.f32 %v246, %v269
        %v272 = vxor.u32 %v271, 2147483648
        %v273 = vmul.f32 %v272, 1.442695
        %v274 = vpow.pop %v273
        %v275 = vadd.f32 %v274, 1.0
        %v276 = vrcp.pop %v275
        %v277 = vmul.f32 %v275, %v276
        %v278 = vsub.f32 1.0, %v277
        %v279 = vmul.f32 %v276, %v278
        %v280 = vadd.f32 %v276, %v279
        %vm281 = vweird.f32 %v275
        %vm282 = vweird.f32 %v276
        %vm283 = vmor %vm281, %vm282
        %v284 = vsel %vm283, %v276, %v280
        %v285 = vand.u32 2147483647, %v275
        %vm286 = vcmp.eq.f32.partialorder %v285, 8.507059e+37
        %v287 = vand.u32 %v275, 2147483648
        %v288 = vor.u32 1.1754944e-38, %v287
        %v289 = vsel %vm286, %v288, %v284
        %v290 = vmul.f32 1.0, %v289
        %v292 = vperm.slane %v240, 0
        %293 = vrot.lane.b32.xlu0 %v292, 64
        %v294 = vpop.permute.xlu0 %293
        %v296 = vadd.f32 %v269, %v294
        %298 = vrot.lane.b32.xlu0 %v296, 64
        %v299 = vpop.permute.xlu0 %298
        %v301 = vmul.f32 %v290, %v299
        %303 = vrot.lane.b32.xlu0 %v301, 64
        %v304 = vpop.permute.xlu0 %303
        %v306 = vadd.f32 %v246, %v304
        %v307 = vtanh.pop %v306
        %309 = vrot.lane.b32.xlu0 %v307, 64
        %v310 = vpop.permute.xlu0 %309
        %v312 = vsub.f32 %v245, %v310
        %314 = vrot.lane.b32.xlu0 %v312, 32
        %v315 = vpop.permute.xlu0 %314
        %v317 = vmul.f32 %v290, %v315
        %319 = vrot.lane.b32.xlu0 %v317, 32
        %v320 = vpop.permute.xlu0 %319
        %v322 = vadd.f32 %v307, %v320
        %s323 = scalar_lea.vmem %s210, 2 [#allocation3]
        %v324 = vld [vmem:[%s323] sm:$0x3]
        %326 = vrot.lane.b32.xlu0 %v322, 64
        %v327 = vpop.permute.xlu0 %326
        %v328 = vsel %vm247, %v327, 0
        %330 = vmatpush.msra.mxu0 0.0
        %331 = vmatpush.msra.mxu0 0.0
        %332 = vmatpush.msra.mxu0 0.0
        %333 = vmatpush.msra.mxu0 0.0
        %334 = vmatpush.msra.mxu0 0.0
        %335 = vmatpush.msra.mxu0 0.0
        %336 = vmatpush.msra.mxu0 0.0
        %337 = vmatpush.msra.mxu0 0.0
        %338 = vmatpush.msra.mxu0 0.0
        %339 = vmatpush.msra.mxu0 0.0
        %340 = vmatpush.msra.mxu0 0.0
        %341 = vmatpush.msra.mxu0 0.0
        %342 = vmatpush.msra.mxu0 %v244
        %343 = vmatpush.msra.mxu0 %v243
        %344 = vmatpush.msra.mxu0 %v242
        %345 = vmatpush.msra.mxu0 %v241
        %346 = vmatmul.f32.gmra.mxu0 %v328
        %v347 = vpop.f32.mrf.mxu0
        %v348 = vadd.f32 0.0, %v347
        %349 = vdwg.mxu0
        %v350 = vadd.f32 %v324, %v348
        %v351 = vxor.u32 %v350, 2147483648
        %v352 = vmul.f32 %v351, 1.442695
        %v353 = vpow.pop %v352
        %v354 = vadd.f32 %v353, 1.0
        %v355 = vrcp.pop %v354
        %v356 = vmul.f32 %v354, %v355
        %v357 = vsub.f32 1.0, %v356
        %v358 = vmul.f32 %v355, %v357
        %v359 = vadd.f32 %v355, %v358
        %vm360 = vweird.f32 %v354
        %vm361 = vweird.f32 %v355
        %vm362 = vmor %vm360, %vm361
        %v363 = vsel %vm362, %v355, %v359
        %v364 = vand.u32 2147483647, %v354
        %vm365 = vcmp.eq.f32.partialorder %v364, 8.507059e+37
        %v366 = vand.u32 %v354, 2147483648
        %v367 = vor.u32 1.1754944e-38, %v366
        %v368 = vsel %vm365, %v367, %v363
        %v369 = vmul.f32 1.0, %v368
        %v370 = vadd.f32 %v348, %v294
        %372 = vrot.lane.b32.xlu0 %v370, 64
        %v373 = vpop.permute.xlu0 %372
        %v375 = vmul.f32 %v369, %v373
        %377 = vrot.lane.b32.xlu0 %v375, 64
        %v378 = vpop.permute.xlu0 %377
        %v380 = vadd.f32 %v324, %v378
        %v381 = vtanh.pop %v380
        %v382 = vsub.f32 %v322, %v381
        %384 = vrot.lane.b32.xlu0 %v382, 96
        %v385 = vpop.permute.xlu0 %384
        %v387 = vmul.f32 %v369, %v385
        %389 = vrot.lane.b32.xlu0 %v387, 32
        %v390 = vpop.permute.xlu0 %389
        %v392 = vadd.f32 %v381, %v390
        %s393 = scalar_lea.vmem %s210, 4 [#allocation3]
        %v394 = vld [vmem:[%s393] sm:$0x3]
        %396 = vrot.lane.b32.xlu0 %v392, 64
        %v397 = vpop.permute.xlu0 %396
        %v398 = vsel %vm247, %v397, 0
        %400 = vmatpush.msra.mxu0 0.0
        %401 = vmatpush.msra.mxu0 0.0
        %402 = vmatpush.msra.mxu0 0.0
        %403 = vmatpush.msra.mxu0 0.0
        %404 = vmatpush.msra.mxu0 0.0
        %405 = vmatpush.msra.mxu0 0.0
        %406 = vmatpush.msra.mxu0 0.0
        %407 = vmatpush.msra.mxu0 0.0
        %408 = vmatpush.msra.mxu0 0.0
        %409 = vmatpush.msra.mxu0 0.0
        %410 = vmatpush.msra.mxu0 0.0
        %411 = vmatpush.msra.mxu0 0.0
        %412 = vmatpush.msra.mxu0 %v244
        %413 = vmatpush.msra.mxu0 %v243
        %414 = vmatpush.msra.mxu0 %v242
        %415 = vmatpush.msra.mxu0 %v241
        %416 = vmatmul.f32.gmra.mxu0 %v398
        %v417 = vpop.f32.mrf.mxu0
        %v418 = vadd.f32 0.0, %v417
        %419 = vdwg.mxu0
        %v420 = vadd.f32 %v394, %v418
        %v421 = vxor.u32 %v420, 2147483648
        %v422 = vmul.f32 %v421, 1.442695
        %v423 = vpow.pop %v422
        %v424 = vadd.f32 %v423, 1.0
        %v425 = vrcp.pop %v424
        %v426 = vmul.f32 %v424, %v425
        %v427 = vsub.f32 1.0, %v426
        %v428 = vmul.f32 %v425, %v427
        %v429 = vadd.f32 %v425, %v428
        %vm430 = vweird.f32 %v424
        %vm431 = vweird.f32 %v425
        %vm432 = vmor %vm430, %vm431
        %v433 = vsel %vm432, %v425, %v429
        %v434 = vand.u32 2147483647, %v424
        %vm435 = vcmp.eq.f32.partialorder %v434, 8.507059e+37
        %v436 = vand.u32 %v424, 2147483648
        %v437 = vor.u32 1.1754944e-38, %v436
        %v438 = vsel %vm435, %v437, %v433
        %v439 = vmul.f32 1.0, %v438
        %v440 = vadd.f32 %v418, %v294
        %442 = vrot.lane.b32.xlu0 %v440, 64
        %v443 = vpop.permute.xlu0 %442
        %v445 = vmul.f32 %v439, %v443
        %447 = vrot.lane.b32.xlu0 %v445, 64
        %v448 = vpop.permute.xlu0 %447
        %v450 = vadd.f32 %v394, %v448
        %v451 = vtanh.pop %v450
        %v452 = vsub.f32 %v392, %v451
        %454 = vrot.lane.b32.xlu0 %v452, 96
        %v455 = vpop.permute.xlu0 %454
        %v457 = vmul.f32 %v439, %v455
        %459 = vrot.lane.b32.xlu0 %v457, 32
        %v460 = vpop.permute.xlu0 %459
        %v462 = vadd.f32 %v451, %v460
        %s463 = scalar_lea.vmem %s210, 6 [#allocation3]
        %v464 = vld [vmem:[%s463] sm:$0x3]
        %466 = vrot.lane.b32.xlu0 %v462, 64
        %v467 = vpop.permute.xlu0 %466
        %v468 = vsel %vm247, %v467, 0
        %470 = vmatpush.msra.mxu0 0.0
        %471 = vmatpush.msra.mxu0 0.0
        %472 = vmatpush.msra.mxu0 0.0
        %473 = vmatpush.msra.mxu0 0.0
        %474 = vmatpush.msra.mxu0 0.0
        %475 = vmatpush.msra.mxu0 0.0
        %476 = vmatpush.msra.mxu0 0.0
        %477 = vmatpush.msra.mxu0 0.0
        %478 = vmatpush.msra.mxu0 0.0
        %479 = vmatpush.msra.mxu0 0.0
        %480 = vmatpush.msra.mxu0 0.0
        %481 = vmatpush.msra.mxu0 0.0
        %482 = vmatpush.msra.mxu0 %v244
        %483 = vmatpush.msra.mxu0 %v243
        %484 = vmatpush.msra.mxu0 %v242
        %485 = vmatpush.msra.mxu0 %v241
        %486 = vmatmul.f32.gmra.mxu0 %v468
        %v487 = vpop.f32.mrf.mxu0
        %v488 = vadd.f32 0.0, %v487
        %489 = vdwg.mxu0
        %v490 = vadd.f32 %v464, %v488
        %v491 = vxor.u32 %v490, 2147483648
        %v492 = vmul.f32 %v491, 1.442695
        %v493 = vpow.pop %v492
        %v494 = vadd.f32 %v493, 1.0
        %v495 = vrcp.pop %v494
        %v496 = vmul.f32 %v494, %v495
        %v497 = vsub.f32 1.0, %v496
        %v498 = vmul.f32 %v495, %v497
        %v499 = vadd.f32 %v495, %v498
        %vm500 = vweird.f32 %v494
        %vm501 = vweird.f32 %v495
        %vm502 = vmor %vm500, %vm501
        %v503 = vsel %vm502, %v495, %v499
        %v504 = vand.u32 2147483647, %v494
        %vm505 = vcmp.eq.f32.partialorder %v504, 8.507059e+37
        %v506 = vand.u32 %v494, 2147483648
        %v507 = vor.u32 1.1754944e-38, %v506
        %v508 = vsel %vm505, %v507, %v503
        %v509 = vmul.f32 1.0, %v508
        %v510 = vadd.f32 %v488, %v294
        %512 = vrot.lane.b32.xlu0 %v510, 64
        %v513 = vpop.permute.xlu0 %512
        %v515 = vmul.f32 %v509, %v513
        %517 = vrot.lane.b32.xlu0 %v515, 64
        %v518 = vpop.permute.xlu0 %517
        %v520 = vadd.f32 %v464, %v518
        %v521 = vtanh.pop %v520
        %v522 = vsub.f32 %v462, %v521
        %524 = vrot.lane.b32.xlu0 %v522, 96
        %v525 = vpop.permute.xlu0 %524
        %v527 = vmul.f32 %v509, %v525
        %529 = vrot.lane.b32.xlu0 %v527, 32
        %v530 = vpop.permute.xlu0 %529
        %v532 = vadd.f32 %v521, %v530
        %534 = vrot.lane.b32.xlu0 %v532, 64
        %v535 = vpop.permute.xlu0 %534
        %vm537 = vcmask 254976
        %538 = vst.msk [vmem:[#allocation2] sm:$0x3] %vm537, %v535
        %p539 = scmp.eq.s32.totalorder %s20, 1
        // Predicated region
        $region49: #{tpu_custom_call.1} parent=39 // pred_check
          %p540 = pneg %p539
        $region50: #{tpu_custom_call.1} parent=39 // pred_check_branch
          %542 = sbr.rel (%p540) target = $region52
        $region51: #{tpu_custom_call.1} parent=39 // pred_region
          %v543 = vld [vmem:[%s3] sm:$0xff]
          %v544 = vld [vmem:[%s3 + $0x8] sm:$0xff]
          %v545 = vld [vmem:[%s3 + $0x10] sm:$0xff]
          %v546 = vld [vmem:[%s3 + $0x18] sm:$0xff]
          %v547 = vld [vmem:[%s4] sm:$0x1]
          %v549 = vperm.slane %v547, 0
          %v551 = vsel %vm247, %v535, 0
          %553 = vmatpush.msra.mxu0 0.0
          %554 = vmatpush.msra.mxu0 0.0
          %555 = vmatpush.msra.mxu0 0.0
          %556 = vmatpush.msra.mxu0 0.0
          %557 = vmatpush.msra.mxu0 0.0
          %558 = vmatpush.msra.mxu0 0.0
          %559 = vmatpush.msra.mxu0 0.0
          %560 = vmatpush.msra.mxu0 0.0
          %561 = vmatpush.msra.mxu0 0.0
          %562 = vmatpush.msra.mxu0 0.0
          %563 = vmatpush.msra.mxu0 0.0
          %564 = vmatpush.msra.mxu0 0.0
          %565 = vmatpush.msra.mxu0 %v546
          %566 = vmatpush.msra.mxu0 %v545
          %567 = vmatpush.msra.mxu0 %v544
          %568 = vmatpush.msra.mxu0 %v543
          %569 = vmatmul.f32.gmra.mxu0 %v551
          %v570 = vpop.f32.mrf.mxu0
          %v571 = vadd.f32 %v549, %v570
          %572 = vdwg.mxu0
          %vm573 = vcmask 58368
          %574 = vst.msk [vmem:[#allocation6] sm:$0x3] %vm573, %v571
        $region52: #{tpu_custom_call.1} parent=39 // pred_fallthru
          _
        // Predicated region
        $region53: #{tpu_custom_call.1} parent=39 // pred_check
          %p575 = pneg %p143
        $region54: #{tpu_custom_call.1} parent=39 // pred_check_branch
          %577 = sbr.rel (%p575) target = $region56
        $region55: #{tpu_custom_call.1} parent=39 // pred_region
          %579 = vsyncadd [#allocation5], 0
          %s581 = sshll.u32 [#allocation6], 4
          %s582 = int_to_ptr.vmem [resolvable:$true] %s581
          %s583 = sshll.u32 %s5, 4
          %s584 = int_to_ptr.hbm [resolvable:$true] %s583
          %586 = dma.vmem_to_hbm [thread:$0]  %s582, 32, %s584, [#allocation5]
        $region56: #{tpu_custom_call.1} parent=39 // pred_fallthru
          _
        // Predicated region
        $region57: #{tpu_custom_call.1} parent=39 // pred_check
          %p587 = pneg %p143
        $region58: #{tpu_custom_call.1} parent=39 // pred_check_branch
          %589 = sbr.rel (%p587) target = $region60
        $region59: #{tpu_custom_call.1} parent=39 // pred_region
          %591 = dma.done [#allocation5], 32
        $region60: #{tpu_custom_call.1} parent=39 // pred_fallthru
          _
      $region40: #{tpu_custom_call.1} parent=5 // pred_fallthru
        _
      %p592 = scmp.le.s32.totalorder 2, %s15
      // Predicated region
      $region61: #{tpu_custom_call.1} parent=5 // pred_check
        %p593 = pneg %p592
      $region62: #{tpu_custom_call.1} parent=5 // pred_check_branch
        %595 = sbr.rel (%p593) target = $region64
      $region63: #{tpu_custom_call.1} parent=5 // pred_region
        %s596 = ssub.s32 %s15, 2
      $region64: #{tpu_custom_call.1} parent=5 // pred_fallthru
        _
    $region6: #{tpu_custom_call.1} parent=1 // loop_footer
      %s19 = sadd.s32 1, %s15
    $region7: #{tpu_custom_call.1} parent=1 // loop_footer_branch
      %14 = sbr.rel target = $region3
    $region8: #{tpu_custom_call.1} parent=1 // loop_exit
      _
    %597 = vsyncpa [#allocation4], 1
    %s598 = scalar_lea.sflag [#allocation4], 1
    %599 = vsyncpa %s598, 1
    %600 = vsyncpa [#allocation5], 1
    %s601 = scalar_lea.sflag [#allocation5], 1
    %602 = vsyncpa %s601, 1

</llo_original>
